<compile_context>
chip_gen: v7x
topology: tpu7x:2x2x1
jax: 0.10.0
libtpu: 0.0.40
codegen_flags: <defaults>
</compile_context>

<pallas_src>
import functools

import jax
import jax.numpy as jnp
from jax.experimental import pallas as pl
from jax.experimental.pallas import tpu as pltpu


def _se_kernel(x_ref, wd_ref, bd_ref, wu_ref, bu_ref, o_ref, *, hw_true, use_mxu):
    # x_ref: (TB, C, HW) tile in the input's native storage dtype.
    x = x_ref[...]

    # Global average pool with f32 accumulation (no full-tile f32 copy).
    pooled = jnp.sum(x, axis=-1, dtype=jnp.float32) * (1.0 / hw_true)   # (TB, C)

    wd = wd_ref[...]   # (C, I) f32  (pre-transposed in the wrapper)
    bd = bd_ref[...]   # (1, I) f32
    wu = wu_ref[...]   # (I, C) f32  (pre-transposed in the wrapper)
    bu = bu_ref[...]   # (1, C) f32

    if use_mxu:
        # Realistic RepVGG channel counts: use the (idle) MXU for the GEMVs.
        h = jnp.dot(pooled, wd, preferred_element_type=jnp.float32) + bd
        h = jnp.maximum(h, 0.0)
        u = jnp.dot(h, wu, preferred_element_type=jnp.float32) + bu
    else:
        # Tiny C/I: VPU broadcast-multiply + reduce (avoid tiny-matmul pads).
        h = jnp.sum(pooled[:, :, None] * wd[None, :, :], axis=1) + bd   # (TB, I)
        h = jnp.maximum(h, 0.0)
        u = jnp.sum(h[:, :, None] * wu[None, :, :], axis=1) + bu        # (TB, C)

    s = jax.nn.sigmoid(u)                                               # (TB, C)

    # Gate multiply in the storage dtype (no cast-up of the streamed tile).
    o_ref[...] = x * s.astype(x.dtype)[:, :, None]


def _vmem_capacity_bytes():
    try:
        info = pltpu.get_tpu_info()
        cap = getattr(info, "vmem_capacity_bytes", None)
        if cap:
            return int(cap)
    except Exception:
        pass
    return 64 * 1024 * 1024   # conservative: v7x per-TensorCore VMEM


def se_block(x_nchw, w_down, b_down, w_up, b_up):
    """w_down: (I, C, 1, 1), b_down: (I,), w_up: (C, I, 1, 1), b_up: (C,)."""
    N, C, H, W = x_nchw.shape
    I = w_down.shape[0]
    HW = H * W
    dtype = x_nchw.dtype
    itemsize = jnp.dtype(dtype).itemsize

    # --- VMEM-budget-aware block sizing -------------------------------------
    vmem_cap = _vmem_capacity_bytes()
    # Leave headroom below physical VMEM (v7x: 64 MiB total -> 48 MiB limit;
    # v5e/v6e: 128 MiB total -> 96 MiB limit).
    vmem_limit = min(vmem_cap * 3 // 4, 96 * 1024 * 1024)
    # 2 input buffers + 2 output buffers per block, plus temp headroom.
    block_budget = vmem_limit // 6
    target_block = min(block_budget, 8 * 1024 * 1024)

    per_image_bytes = C * HW * itemsize
    if per_image_bytes > block_budget:
        # TODO(synk): tile the HW axis (two-pass pool) for very large C*H*W
        # images instead of relying on a raised VMEM limit.
        TB = 1
        vmem_limit = min(vmem_cap, max(vmem_limit, per_image_bytes * 5))
    else:
        TB = max(1, target_block // per_image_bytes)
    TB = min(TB, N)
    if N >= 2:
        TB = min(TB, pl.cdiv(N, 2))   # >= 2 grid steps -> both v7x TCs active
    grid = (pl.cdiv(N, TB),)

    # --- Parameters (tiny; pre-transposed so both kernel paths contract on
    #     the shared axis without in-kernel transposes) -----------------------
    x = x_nchw.reshape(N, C, HW)                                 # free reshape
    wd_t = w_down.reshape(I, C).T.astype(jnp.float32)            # (C, I)
    bd = b_down.reshape(1, I).astype(jnp.float32)
    wu_t = w_up.reshape(C, I).T.astype(jnp.float32)              # (I, C)
    bu = b_up.reshape(1, C).astype(jnp.float32)

    use_mxu = (C * I) >= 4096   # e.g. C>=256, I=C/16 in real RepVGG configs
    kernel = functools.partial(_se_kernel, hw_true=float(HW), use_mxu=use_mxu)

    param_bytes = (2 * C * I + C + I) * 4
    cost = pl.CostEstimate(
        flops=2 * N * C * HW + 4 * N * C * I,
        transcendentals=N * C,
        bytes_accessed=2 * N * C * HW * itemsize + param_bytes,
    )

    out = pl.pallas_call(
        kernel,
        out_shape=jax.ShapeDtypeStruct((N, C, HW), dtype),
        grid_spec=pltpu.PrefetchScalarGridSpec(
            num_scalar_prefetch=0,
            grid=grid,
            in_specs=[
                pl.BlockSpec((TB, C, HW), lambda n: (n, 0, 0)),   # x stream
                pl.BlockSpec((C, I), lambda n: (0, 0)),           # w_down^T
                pl.BlockSpec((1, I), lambda n: (0, 0)),           # b_down
                pl.BlockSpec((I, C), lambda n: (0, 0)),           # w_up^T
                pl.BlockSpec((1, C), lambda n: (0, 0)),           # b_up
            ],
            out_specs=pl.BlockSpec((TB, C, HW), lambda n: (n, 0, 0)),
        ),
        compiler_params=pltpu.CompilerParams(
            dimension_semantics=("parallel",),     # batch images independent
            vmem_limit_bytes=int(vmem_limit),
        ),
        cost_estimate=cost,
    )(x, wd_t, bd, wu_t, bu)

    return out.reshape(N, C, H, W)


def se_block_ref(x, w_down, b_down, w_up, b_up):
    """Pure-JAX reference mirroring the PyTorch forward."""
    N, C, H, W = x.shape
    I = w_down.shape[0]
    m = jnp.mean(x.astype(jnp.float32), axis=(2, 3))            # avg_pool2d -> (N, C)
    h = jax.nn.relu(m @ w_down.reshape(I, C).T + b_down)        # down + relu
    u = jax.nn.sigmoid(h @ w_up.reshape(C, I).T + b_up)         # up + sigmoid
    return (x.astype(jnp.float32) * u[:, :, None, None]).astype(x.dtype)


if __name__ == "__main__":
    # Small shapes consistent with the module: N=2, C=4, H=W=16, internal=2
    N, C, H, W = 2, 4, 16, 16
    INTERNAL = 2

    key = jax.random.PRNGKey(0)
    kx, k1, k2, k3, k4 = jax.random.split(key, 5)

    x = jax.random.normal(kx, (N, C, H, W), dtype=jnp.float32)
    # Deterministic synthetic parameters (shapes match nn.Conv2d 1x1 layers)
    w_down = 0.3 * jax.random.normal(k1, (INTERNAL, C, 1, 1), dtype=jnp.float32)
    b_down = 0.1 * jax.random.normal(k2, (INTERNAL,), dtype=jnp.float32)
    w_up = 0.3 * jax.random.normal(k3, (C, INTERNAL, 1, 1), dtype=jnp.float32)
    b_up = 0.1 * jax.random.normal(k4, (C,), dtype=jnp.float32)

    out = se_block(x, w_down, b_down, w_up, b_up)
    out = jax.block_until_ready(out)

    ref = se_block_ref(x, w_down, b_down, w_up, b_up)
    assert out.shape == (N, C, H, W)
    assert jnp.allclose(out, ref, atol=1e-5, rtol=1e-5), "mismatch vs reference"

    print("KERNEL_OK")
</pallas_src>

<mosaic_0001>
module attributes {stable_mosaic.version = 11 : i64} {
  func.func @_se_kernel(%arg0: i32, %arg1: memref<1x4x256xf32, #tpu.memory_space<vmem>>, %arg2: memref<4x2xf32, #tpu.memory_space<vmem>>, %arg3: memref<1x2xf32, #tpu.memory_space<vmem>>, %arg4: memref<2x4xf32, #tpu.memory_space<vmem>>, %arg5: memref<1x4xf32, #tpu.memory_space<vmem>>, %arg6: memref<1x4x256xf32, #tpu.memory_space<vmem>>) attributes {dimension_semantics = [#tpu.dimension_semantics<parallel>], iteration_bounds = array<i64: 2>, scalar_prefetch = 0 : i64, scratch_operands = 0 : i64, tpu.core_type = #tpu.core_type<tc>, window_params = [{transform_indices = @transform_0, window_bounds = array<i64: 1, 4, 256>}, {pipeline_mode = #tpu.pipeline_mode<synchronous>, transform_indices = @transform_1, window_bounds = array<i64: 4, 2>}, {pipeline_mode = #tpu.pipeline_mode<synchronous>, transform_indices = @transform_2, window_bounds = array<i64: 1, 2>}, {pipeline_mode = #tpu.pipeline_mode<synchronous>, transform_indices = @transform_3, window_bounds = array<i64: 2, 4>}, {pipeline_mode = #tpu.pipeline_mode<synchronous>, transform_indices = @transform_4, window_bounds = array<i64: 1, 4>}, {transform_indices = @transform_5, window_bounds = array<i64: 1, 4, 256>}]} {
    %c0 = arith.constant 0 : index
    %c0_0 = arith.constant 0 : index
    %c0_1 = arith.constant 0 : index
    %0 = vector.load %arg1[%c0, %c0_0, %c0_1] : memref<1x4x256xf32, #tpu.memory_space<vmem>>, vector<1x4x256xf32>
    %cst = arith.constant dense<0.000000e+00> : vector<1x4xf32>
    %1 = vector.multi_reduction <add>, %0, %cst [2] : vector<1x4x256xf32> to vector<1x4xf32>
    %cst_2 = arith.constant 3.906250e-03 : f32
    %2 = vector.broadcast %cst_2 : f32 to vector<1x4xf32>
    %3 = arith.mulf %1, %2 : vector<1x4xf32>
    %c0_3 = arith.constant 0 : index
    %c0_4 = arith.constant 0 : index
    %4 = vector.load %arg2[%c0_3, %c0_4] : memref<4x2xf32, #tpu.memory_space<vmem>>, vector<4x2xf32>
    %c0_5 = arith.constant 0 : index
    %c0_6 = arith.constant 0 : index
    %5 = vector.load %arg3[%c0_5, %c0_6] : memref<1x2xf32, #tpu.memory_space<vmem>>, vector<1x2xf32>
    %c0_7 = arith.constant 0 : index
    %c0_8 = arith.constant 0 : index
    %6 = vector.load %arg4[%c0_7, %c0_8] : memref<2x4xf32, #tpu.memory_space<vmem>>, vector<2x4xf32>
    %c0_9 = arith.constant 0 : index
    %c0_10 = arith.constant 0 : index
    %7 = vector.load %arg5[%c0_9, %c0_10] : memref<1x4xf32, #tpu.memory_space<vmem>>, vector<1x4xf32>
    %8 = vector.shape_cast %3 : vector<1x4xf32> to vector<1x4x1xf32>
    %9 = vector.shape_cast %4 : vector<4x2xf32> to vector<1x4x2xf32>
    %10 = vector.broadcast %8 : vector<1x4x1xf32> to vector<1x4x2xf32>
    %11 = arith.mulf %10, %9 : vector<1x4x2xf32>
    %cst_11 = arith.constant dense<0.000000e+00> : vector<1x2xf32>
    %12 = vector.multi_reduction <add>, %11, %cst_11 [1] : vector<1x4x2xf32> to vector<1x2xf32>
    %13 = arith.addf %12, %5 : vector<1x2xf32>
    %cst_12 = arith.constant 0.000000e+00 : f32
    %14 = vector.broadcast %cst_12 : f32 to vector<1x2xf32>
    %15 = arith.maximumf %13, %14 : vector<1x2xf32>
    %16 = vector.shape_cast %15 : vector<1x2xf32> to vector<1x2x1xf32>
    %17 = vector.shape_cast %6 : vector<2x4xf32> to vector<1x2x4xf32>
    %18 = vector.broadcast %16 : vector<1x2x1xf32> to vector<1x2x4xf32>
    %19 = arith.mulf %18, %17 : vector<1x2x4xf32>
    %cst_13 = arith.constant dense<0.000000e+00> : vector<1x4xf32>
    %20 = vector.multi_reduction <add>, %19, %cst_13 [1] : vector<1x2x4xf32> to vector<1x4xf32>
    %21 = arith.addf %20, %7 : vector<1x4xf32>
    %22 = arith.negf %21 : vector<1x4xf32>
    %23 = math.exp %22 : vector<1x4xf32>
    %cst_14 = arith.constant 1.000000e+00 : f32
    %24 = vector.broadcast %cst_14 : f32 to vector<1x4xf32>
    %25 = arith.addf %24, %23 : vector<1x4xf32>
    %26 = arith.divf %24, %25 : vector<1x4xf32>
    %27 = vector.shape_cast %26 : vector<1x4xf32> to vector<1x4x1xf32>
    %28 = vector.broadcast %27 : vector<1x4x1xf32> to vector<1x4x256xf32>
    %29 = arith.mulf %0, %28 : vector<1x4x256xf32>
    %c0_15 = arith.constant 0 : index
    %c0_16 = arith.constant 0 : index
    %c0_17 = arith.constant 0 : index
    %30 = vector.load %arg6[%c0_15, %c0_16, %c0_17] : memref<1x4x256xf32, #tpu.memory_space<vmem>>, vector<1x4x256xf32>
    tpu.vector_store %arg6[%c0_15, %c0_16, %c0_17], %29 {strides = array<i32>} : memref<1x4x256xf32, #tpu.memory_space<vmem>>, vector<1x4x256xf32>,
    return
  }
  func.func @transform_0(%arg0: i32) -> (i32, i32, i32) {
    %c0_i32 = arith.constant 0 : i32
    %c0_i32_0 = arith.constant 0 : i32
    %c0_i32_1 = arith.constant 0 : i32
    return %arg0, %c0_i32, %c0_i32_0 : i32, i32, i32
  }
  func.func @transform_1(%arg0: i32) -> (i32, i32) {
    %c0_i32 = arith.constant 0 : i32
    %c0_i32_0 = arith.constant 0 : i32
    %c0_i32_1 = arith.constant 0 : i32
    return %c0_i32, %c0_i32_0 : i32, i32
  }
  func.func @transform_2(%arg0: i32) -> (i32, i32) {
    %c0_i32 = arith.constant 0 : i32
    %c0_i32_0 = arith.constant 0 : i32
    %c0_i32_1 = arith.constant 0 : i32
    return %c0_i32, %c0_i32_0 : i32, i32
  }
  func.func @transform_3(%arg0: i32) -> (i32, i32) {
    %c0_i32 = arith.constant 0 : i32
    %c0_i32_0 = arith.constant 0 : i32
    %c0_i32_1 = arith.constant 0 : i32
    return %c0_i32, %c0_i32_0 : i32, i32
  }
  func.func @transform_4(%arg0: i32) -> (i32, i32) {
    %c0_i32 = arith.constant 0 : i32
    %c0_i32_0 = arith.constant 0 : i32
    %c0_i32_1 = arith.constant 0 : i32
    return %c0_i32, %c0_i32_0 : i32, i32
  }
  func.func @transform_5(%arg0: i32) -> (i32, i32, i32) {
    %c0_i32 = arith.constant 0 : i32
    %c0_i32_0 = arith.constant 0 : i32
    %c0_i32_1 = arith.constant 0 : i32
    return %arg0, %c0_i32, %c0_i32_0 : i32, i32, i32
  }
}

</mosaic_0001>

<llo_original>
// kernel: tpu_custom_call.1
$region0: #{tpu_custom_call.1}
  #allocation0 [shape = 'u32[]', space=smem, size = 0x4, offset = 0x4, fixed_abs, tag = 'smem constant byte address 0x4 - core index']
  #allocation1 [shape = 'u32[144,128]{1,0:T(1,128)}', space=vmem, size = 0x12000, scoped, tag = 'internal scratch']
  %s0 = inlined_call_operand.hbm [shape: f32[2,4,256], index: 0, kind: input, shape index: {}]
  %s1 = inlined_call_operand.vmem [shape: f32[4,2], index: 1, kind: input, shape index: {}]
  %s2 = inlined_call_operand.vmem [shape: f32[1,2], index: 2, kind: input, shape index: {}]
  %s3 = inlined_call_operand.vmem [shape: f32[2,4], index: 3, kind: input, shape index: {}]
  %s4 = inlined_call_operand.vmem [shape: f32[1,4], index: 4, kind: input, shape index: {}]
  %s5 = inlined_call_operand.hbm [shape: f32[2,4,256], index: 5, kind: output, shape index: {}]
  %s6 = sld [smem:[#allocation0]]
  $region57: #{tpu_custom_call.1} parent=0
    _
  %s8 = ssub.s32 1, %s6
  %s9 = scalar_select 0, %s8, %s6
  $region1: #{tpu_custom_call.1} parent=0
    #allocation2 [shape = 'u8[8192]{0}', space=vmem, size = 0x2000, scoped, tag = 'input window, operand 0']
    #allocation3 [shape = 's32[2]{0}', space=sflag, size = 0x8, scoped, tag = 'scoped memory for tpu_custom_call.1']
    #allocation4 [shape = 's32[2]{0}', space=sflag, size = 0x8, scoped, tag = 'scoped memory for tpu_custom_call.1']
    #allocation5 [shape = 'u8[8192]{0}', space=vmem, size = 0x2000, scoped, tag = 'output window, operand 0']
    %10 = vsyncpa [#allocation3], 0
    %s11 = scalar_lea.sflag [#allocation3], 1
    %12 = vsyncpa %s11, 0
    %13 = vsyncpa [#allocation4], 0
    %s14 = scalar_lea.sflag [#allocation4], 1
    %15 = vsyncpa %s14, 0
    loop: start=0, step=1, limit=4
    $region2: #{tpu_custom_call.1} parent=1 // loop_pre_header
      _
    $region3: #{tpu_custom_call.1} parent=1 // loop_header
      %s17 = sphi 0, %s21
      %p18 = scmp.ge.s32.totalorder %s17, 4
      %s27 = sphi 0, %s29
      %s30 = sphi 0, %s27
      %s31 = sphi 0, %s30
      %s47 = sphi 0, %s31
      %s51 = sphi 0, %s51
      %s53 = sphi 0, %s51
      %s54 = sphi 0, %s53
      %s68 = sphi 0, %s54
      %s72 = sphi 0, %s72
      %s74 = sphi 0, %s72
      %s75 = sphi 0, %s74
      %s89 = sphi 0, %s75
      %s93 = sphi 0, %s93
      %s95 = sphi 0, %s93
      %s96 = sphi 0, %s95
      %s110 = sphi 0, %s96
      %s114 = sphi 0, %s114
      %s116 = sphi 0, %s114
      %s117 = sphi 0, %s116
      %s131 = sphi 0, %s117
      %s137 = sphi 0, %s139
      %s140 = sphi 0, %s137
      %s141 = sphi 0, %s140
      %s157 = sphi 0, %s141
    $region4: #{tpu_custom_call.1} parent=1 // loop_header_branch
      %20 = sbr.rel (%p18) target = $region8
    $region5: #{tpu_custom_call.1} parent=1 // loop_body
      %s22 = ssub.s32 %s17, 1
      %s23 = ssub.s32 %s17, 2
      %s24 = sadd.s32 %s17, 1
      %s25 = ssub.s32 %s17, %s24
      %p26 = scmp.eq.s32.totalorder %s25, 0
      %s28 = sadd.s32 %s27, 1
      %s29 = scalar_select %p26, %s27, %s28
      %p32 = pneg %p26
      %p33 = scmp.eq.s32.totalorder %s17, 1
      %p34 = por %p32, %p33
      %p35 = scmp.ne.s32.totalorder %s27, %s30
      %p36 = scmp.eq.s32.totalorder %s17, 0
      %p37 = por %p35, %p36
      %p38 = scmp.ne.s32.totalorder %s27, %s30
      %p39 = scmp.eq.s32.totalorder %s22, 1
      %p40 = por %p38, %p39
      %p41 = scmp.ne.s32.totalorder %s30, %s31
      %p42 = scmp.eq.s32.totalorder %s22, 0
      %p43 = por %p41, %p42
      %p44 = scmp.ne.s32.totalorder %s30, %s31
      %p45 = scmp.eq.s32.totalorder %s23, 1
      %p46 = por %p44, %p45
      %p48 = scmp.ne.s32.totalorder %s31, %s47
      %p49 = scmp.eq.s32.totalorder %s23, 0
      %p50 = por %p48, %p49
      %s52 = sadd.s32 %s51, 1
      %p55 = scmp.eq.s32.totalorder %s17, 1
      %p56 = scmp.ne.s32.totalorder %s51, %s53
      %p57 = scmp.eq.s32.totalorder %s17, 0
      %p58 = por %p56, %p57
      %p59 = scmp.ne.s32.totalorder %s51, %s53
      %p60 = scmp.eq.s32.totalorder %s22, 1
      %p61 = por %p59, %p60
      %p62 = scmp.ne.s32.totalorder %s53, %s54
      %p63 = scmp.eq.s32.totalorder %s22, 0
      %p64 = por %p62, %p63
      %p65 = scmp.ne.s32.totalorder %s53, %s54
      %p66 = scmp.eq.s32.totalorder %s23, 1
      %p67 = por %p65, %p66
      %p69 = scmp.ne.s32.totalorder %s54, %s68
      %p70 = scmp.eq.s32.totalorder %s23, 0
      %p71 = por %p69, %p70
      %s73 = sadd.s32 %s72, 1
      %p76 = scmp.eq.s32.totalorder %s17, 1
      %p77 = scmp.ne.s32.totalorder %s72, %s74
      %p78 = scmp.eq.s32.totalorder %s17, 0
      %p79 = por %p77, %p78
      %p80 = scmp.ne.s32.totalorder %s72, %s74
      %p81 = scmp.eq.s32.totalorder %s22, 1
      %p82 = por %p80, %p81
      %p83 = scmp.ne.s32.totalorder %s74, %s75
      %p84 = scmp.eq.s32.totalorder %s22, 0
      %p85 = por %p83, %p84
      %p86 = scmp.ne.s32.totalorder %s74, %s75
      %p87 = scmp.eq.s32.totalorder %s23, 1
      %p88 = por %p86, %p87
      %p90 = scmp.ne.s32.totalorder %s75, %s89
      %p91 = scmp.eq.s32.totalorder %s23, 0
      %p92 = por %p90, %p91
      %s94 = sadd.s32 %s93, 1
      %p97 = scmp.eq.s32.totalorder %s17, 1
      %p98 = scmp.ne.s32.totalorder %s93, %s95
      %p99 = scmp.eq.s32.totalorder %s17, 0
      %p100 = por %p98, %p99
      %p101 = scmp.ne.s32.totalorder %s93, %s95
      %p102 = scmp.eq.s32.totalorder %s22, 1
      %p103 = por %p101, %p102
      %p104 = scmp.ne.s32.totalorder %s95, %s96
      %p105 = scmp.eq.s32.totalorder %s22, 0
      %p106 = por %p104, %p105
      %p107 = scmp.ne.s32.totalorder %s95, %s96
      %p108 = scmp.eq.s32.totalorder %s23, 1
      %p109 = por %p107, %p108
      %p111 = scmp.ne.s32.totalorder %s96, %s110
      %p112 = scmp.eq.s32.totalorder %s23, 0
      %p113 = por %p111, %p112
      %s115 = sadd.s32 %s114, 1
      %p118 = scmp.eq.s32.totalorder %s17, 1
      %p119 = scmp.ne.s32.totalorder %s114, %s116
      %p120 = scmp.eq.s32.totalorder %s17, 0
      %p121 = por %p119, %p120
      %p122 = scmp.ne.s32.totalorder %s114, %s116
      %p123 = scmp.eq.s32.totalorder %s22, 1
      %p124 = por %p122, %p123
      %p125 = scmp.ne.s32.totalorder %s116, %s117
      %p126 = scmp.eq.s32.totalorder %s22, 0
      %p127 = por %p125, %p126
      %p128 = scmp.ne.s32.totalorder %s116, %s117
      %p129 = scmp.eq.s32.totalorder %s23, 1
      %p130 = por %p128, %p129
      %p132 = scmp.ne.s32.totalorder %s117, %s131
      %p133 = scmp.eq.s32.totalorder %s23, 0
      %p134 = por %p132, %p133
      %s135 = ssub.s32 %s17, %s24
      %p136 = scmp.eq.s32.totalorder %s135, 0
      %s138 = sadd.s32 %s137, 1
      %s139 = scalar_select %p136, %s137, %s138
      %p142 = pneg %p136
      %p143 = scmp.eq.s32.totalorder %s17, 1
      %p144 = por %p142, %p143
      %p145 = scmp.ne.s32.totalorder %s137, %s140
      %p146 = scmp.eq.s32.totalorder %s17, 0
      %p147 = por %p145, %p146
      %p148 = scmp.ne.s32.totalorder %s137, %s140
      %p149 = scmp.eq.s32.totalorder %s22, 1
      %p150 = por %p148, %p149
      %p151 = scmp.ne.s32.totalorder %s140, %s141
      %p152 = scmp.eq.s32.totalorder %s22, 0
      %p153 = por %p151, %p152
      %p154 = scmp.ne.s32.totalorder %s140, %s141
      %p155 = scmp.eq.s32.totalorder %s23, 1
      %p156 = por %p154, %p155
      %p158 = scmp.ne.s32.totalorder %s141, %s157
      %p159 = scmp.eq.s32.totalorder %s23, 0
      %p160 = por %p158, %p159
      %p161 = scmp.le.s32.totalorder 1, %s17
      %p162 = scmp.lt.s32.totalorder %s17, 3
      %p163 = pnand %p161, %p162
      %p164 = pneg %p163
      // Predicated region
      $region9: #{tpu_custom_call.1} parent=5 // pred_check
        _
      $region10: #{tpu_custom_call.1} parent=5 // pred_check_branch
        %166 = sbr.rel (%p163) target = $region12
      $region11: #{tpu_custom_call.1} parent=5 // pred_region
        %s167 = ssub.s32 %s17, 1
        // Predicated region
        $region13: #{tpu_custom_call.1} parent=11 // pred_check
          %p168 = pneg %p64
        $region14: #{tpu_custom_call.1} parent=11 // pred_check_branch
          %170 = sbr.rel (%p168) target = $region16
        $region15: #{tpu_custom_call.1} parent=11 // pred_region
          _
        $region16: #{tpu_custom_call.1} parent=11 // pred_fallthru
          _
        // Predicated region
        $region17: #{tpu_custom_call.1} parent=11 // pred_check
          %p171 = pneg %p85
        $region18: #{tpu_custom_call.1} parent=11 // pred_check_branch
          %173 = sbr.rel (%p171) target = $region20
        $region19: #{tpu_custom_call.1} parent=11 // pred_region
          _
        $region20: #{tpu_custom_call.1} parent=11 // pred_fallthru
          _
        // Predicated region
        $region21: #{tpu_custom_call.1} parent=11 // pred_check
          %p174 = pneg %p106
        $region22: #{tpu_custom_call.1} parent=11 // pred_check_branch
          %176 = sbr.rel (%p174) target = $region24
        $region23: #{tpu_custom_call.1} parent=11 // pred_region
          _
        $region24: #{tpu_custom_call.1} parent=11 // pred_fallthru
          _
        // Predicated region
        $region25: #{tpu_custom_call.1} parent=11 // pred_check
          %p177 = pneg %p127
        $region26: #{tpu_custom_call.1} parent=11 // pred_check_branch
          %179 = sbr.rel (%p177) target = $region28
        $region27: #{tpu_custom_call.1} parent=11 // pred_region
          _
        $region28: #{tpu_custom_call.1} parent=11 // pred_fallthru
          _
      $region12: #{tpu_custom_call.1} parent=5 // pred_fallthru
        _
      %p180 = scmp.lt.s32.totalorder %s17, 2
      // Predicated region
      $region29: #{tpu_custom_call.1} parent=5 // pred_check
        %p181 = pneg %p180
      $region30: #{tpu_custom_call.1} parent=5 // pred_check_branch
        %183 = sbr.rel (%p181) target = $region32
      $region31: #{tpu_custom_call.1} parent=5 // pred_region
        // Predicated region
        $region33: #{tpu_custom_call.1} parent=31 // pred_check
          %p184 = pneg %p37
        $region34: #{tpu_custom_call.1} parent=31 // pred_check_branch
          %186 = sbr.rel (%p184) target = $region36
        $region35: #{tpu_custom_call.1} parent=31 // pred_region
          %s187 = sand.u32 %s27, 1
          %s188 = scalar_lea.sflag [#allocation3], %s187
          %s189 = sand.u32 %s27, 1
          %s190 = smul.addr %s189, 8
          %s191 = scalar_lea.vmem [#allocation2], %s190
          %s193 = ssub.s32 128, 128
          %194 = vsyncadd %s188, %s193
          %s195 = smul.addr %s17, 2
          %s196 = smul.addr %s195, 64
          %s197 = scalar_lea.hbm %s0, %s196
          %s199 = sshll.u32 %s191, 4
          %s200 = int_to_ptr.vmem [resolvable:$true] %s199
          %202 = dma.hbm_to_vmem [thread:$0]  %s197, 128, %s200, %s188
        $region36: #{tpu_custom_call.1} parent=31 // pred_fallthru
          _
      $region32: #{tpu_custom_call.1} parent=5 // pred_fallthru
        _
      %p203 = scmp.le.s32.totalorder 1, %s17
      %p204 = scmp.lt.s32.totalorder %s17, 3
      %p205 = pnand %p203, %p204
      %p206 = pneg %p205
      // Predicated region
      $region37: #{tpu_custom_call.1} parent=5 // pred_check
        _
      $region38: #{tpu_custom_call.1} parent=5 // pred_check_branch
        %208 = sbr.rel (%p205) target = $region40
      $region39: #{tpu_custom_call.1} parent=5 // pred_region
        %s209 = ssub.s32 %s17, 1
        %s210 = sand.u32 %s30, 1
        %s211 = scalar_lea.sflag [#allocation3], %s210
        %s212 = sand.u32 %s30, 1
        %s213 = smul.addr %s212, 8
        %s214 = scalar_lea.vmem [#allocation2], %s213
        // Predicated region
        $region41: #{tpu_custom_call.1} parent=39 // pred_check
          %p215 = pneg %p43
        $region42: #{tpu_custom_call.1} parent=39 // pred_check_branch
          %217 = sbr.rel (%p215) target = $region44
        $region43: #{tpu_custom_call.1} parent=39 // pred_region
          %218 = dma.done %s211, 128
        $region44: #{tpu_custom_call.1} parent=39 // pred_fallthru
          _
        %s219 = sand.u32 %s30, 1
        %s220 = scalar_lea.sflag [#allocation3], %s219
        %s221 = sand.u32 %s30, 1
        %s222 = smul.addr %s221, 8
        %s223 = scalar_lea.vmem [#allocation2], %s222
        %p224 = pneg %p43
        %p225 = pneg %p40
        %p226 = pneg %p64
        %p227 = pneg %p61
        %p228 = pneg %p85
        %p229 = pneg %p82
        %p230 = pneg %p106
        %p231 = pneg %p103
        %p232 = pneg %p127
        %p233 = pneg %p124
        %p234 = pneg %p153
        %p235 = pneg %p150
        %s236 = sand.u32 %s140, 1
        %s237 = scalar_lea.sflag [#allocation4], %s236
        %s238 = sand.u32 %s140, 1
        %s239 = smul.addr %s238, 8
        %s240 = scalar_lea.vmem [#allocation5], %s239
        %v241 = vld [vmem:[%s214] sm:$0xff]
        %v243 = vcombine.high %v241, %v241
        %vm245 = vcmask 1043456
        %v246 = vsel %vm245, %v241, 0.0
        %v247 = vsel %vm245, %v243, 0.0
        %v248 = vadd.f32 %v246, %v247
        %249 = vadd.xlane.f32.xlu0 %v248
        %v250 = vpop.xlane.xlu0 %249
        %v251 = vmul.f32 %v250, 0.00390625
        %v252 = vld [vmem:[%s1] sm:$0xf]
        %v253 = vld [vmem:[%s2] sm:$0x1]
        %v254 = vld [vmem:[%s3] sm:$0x3]
        %v255 = vld [vmem:[%s4] sm:$0x1]
        %v256 = vmul.f32 %v251, %v252
        %vm257 = vcmask 11264
        %v258 = vsel %vm257, %v256, 0.0
        %v259 = vrot.slane %v258, 4
        %v260 = vadd.f32 %v258, %v259
        %v261 = vrot.slane %v260, 2
        %v262 = vadd.f32 %v260, %v261
        %v263 = vrot.slane %v262, 1
        %v264 = vadd.f32 %v262, %v263
        %v265 = vadd.f32 %v264, %v253
        %v266 = vmax.f32 %v265, 0.0
        %v267 = vlaneseq
        %v268 = vshrl.u32 %v267, 7
        %v269 = vsub.s32 0, %v268
        %v270 = vrot.slane %v266, %v269
        %272 = vbcast.lane.b32.xlu0 %v270, 256
        %v273 = vpop.permute.xlu0 %272
        %v274 = vmul.f32 %v273, %v254
        %vm275 = vcmask 25600
        %v276 = vsel %vm275, %v274, 0.0
        %v277 = vrot.slane %v276, 4
        %v278 = vadd.f32 %v276, %v277
        %v279 = vrot.slane %v278, 2
        %v280 = vadd.f32 %v278, %v279
        %v281 = vrot.slane %v280, 1
        %v282 = vadd.f32 %v280, %v281
        %v283 = vadd.f32 %v282, %v255
        %v284 = vxor.u32 %v283, 2147483648
        %v285 = vmul.f32 %v284, 1.442695
        %v286 = vpow.pop %v285
        %v287 = vadd.f32 %v286, 1.0
        %v288 = vrcp.pop %v287
        %v289 = vmul.f32 1.0, %v288
        %v290 = vlaneseq
        %v291 = vshrl.u32 %v290, 7
        %v292 = vsub.s32 0, %v291
        %v293 = vrot.slane %v289, %v292
        %295 = vbcast.lane.b32.xlu0 %v293, 256
        %v296 = vpop.permute.xlu0 %295
        %v299 = vunpack.c.l.s4 839922192
        %v300 = vunpack.c.0.s8 %v299
        %v301 = vlaneseq
        %v302 = vshrl.u32 %v301, 7
        %v303 = vsub.s32 %v300, %v302
        %v304 = vrot.slane %v296, %v303
        %v306 = vmul.f32 %v241, %v304
        %307 = vst [vmem:[%s240] sm:$0xff] %v306
        %s308 = sand.u32 %s140, 1
        %s309 = scalar_lea.sflag [#allocation4], %s308
        %s310 = sand.u32 %s140, 1
        %s311 = smul.addr %s310, 8
        %s312 = scalar_lea.vmem [#allocation5], %s311
        // Predicated region
        $region45: #{tpu_custom_call.1} parent=39 // pred_check
          %p313 = pneg %p150
        $region46: #{tpu_custom_call.1} parent=39 // pred_check_branch
          %315 = sbr.rel (%p313) target = $region48
        $region47: #{tpu_custom_call.1} parent=39 // pred_region
          %s317 = ssub.s32 128, 128
          %318 = vsyncadd %s309, %s317
          %s319 = smul.addr %s22, 2
          %s320 = smul.addr %s319, 64
          %s321 = scalar_lea.hbm %s5, %s320
          %s323 = sshll.u32 %s312, 4
          %s324 = int_to_ptr.vmem [resolvable:$true] %s323
          %326 = dma.vmem_to_hbm [thread:$0]  %s324, 128, %s321, %s309
        $region48: #{tpu_custom_call.1} parent=39 // pred_fallthru
          _
      $region40: #{tpu_custom_call.1} parent=5 // pred_fallthru
        _
      %p327 = scmp.le.s32.totalorder 2, %s17
      // Predicated region
      $region49: #{tpu_custom_call.1} parent=5 // pred_check
        %p328 = pneg %p327
      $region50: #{tpu_custom_call.1} parent=5 // pred_check_branch
        %330 = sbr.rel (%p328) target = $region52
      $region51: #{tpu_custom_call.1} parent=5 // pred_region
        %s331 = ssub.s32 %s17, 2
        // Predicated region
        $region53: #{tpu_custom_call.1} parent=51 // pred_check
          %p332 = pneg %p156
        $region54: #{tpu_custom_call.1} parent=51 // pred_check_branch
          %334 = sbr.rel (%p332) target = $region56
        $region55: #{tpu_custom_call.1} parent=51 // pred_region
          %s335 = sand.u32 %s141, 1
          %s336 = scalar_lea.sflag [#allocation4], %s335
          %s337 = sand.u32 %s141, 1
          %s338 = smul.addr %s337, 8
          %s339 = scalar_lea.vmem [#allocation5], %s338
          %340 = dma.done %s336, 128
        $region56: #{tpu_custom_call.1} parent=51 // pred_fallthru
          _
      $region52: #{tpu_custom_call.1} parent=5 // pred_fallthru
        _
    $region6: #{tpu_custom_call.1} parent=1 // loop_footer
      %s21 = sadd.s32 1, %s17
    $region7: #{tpu_custom_call.1} parent=1 // loop_footer_branch
      %16 = sbr.rel target = $region3
    $region8: #{tpu_custom_call.1} parent=1 // loop_exit
      _
    %341 = vsyncpa [#allocation3], 1
    %s342 = scalar_lea.sflag [#allocation3], 1
    %343 = vsyncpa %s342, 1
    %344 = vsyncpa [#allocation4], 1
    %s345 = scalar_lea.sflag [#allocation4], 1
    %346 = vsyncpa %s345, 1

</llo_original>
